<compile_context>
chip_gen: v7x
topology: tpu7x:2x2x1
jax: 0.10.0
libtpu: 0.0.40
codegen_flags: <defaults>
</compile_context>

<pallas_src>
import jax
import jax.numpy as jnp
from jax.experimental import pallas as pl
from jax.experimental.pallas import tpu as pltpu


def _relu_kernel(x_ref, o_ref):
    o_ref[...] = jnp.maximum(x_ref[...], 0).astype(o_ref.dtype)


# Per-block byte budget.  With Pallas' double-buffering of input and output
# blocks this means ~4x in VMEM (8 MiB), comfortably under v5e's 16 MiB
# default scoped VMEM limit, v6e's 32 MiB default, and v7x's 64 MiB physical
# VMEM, while still being large enough to sit at the HBM roofline.
_BLOCK_BYTES = 2 * 1024 * 1024


def _round_up(x, m):
    return (x + m - 1) // m * m


def _round_down(x, m):
    return x // m * m


def _tensorcores_per_chip():
    """2 on v7x (dual TensorCore per chip), 1 on v5e/v6e. Best-effort probe."""
    try:
        kind = jax.devices()[0].device_kind.lower()
    except Exception:
        return 1
    return 2 if ("v7" in kind or "tpu7" in kind) else 1


def _pick_2d(total, itemsize):
    """Pick a free (contiguous) factorization rows*cols == total minimizing
    the (8,128)-padded VMEM footprint (i.e. maximizing sublane/lane density).
    Ties are broken toward more rows, which helps row-tiling / the v7x
    two-core split. cols is capped so an 8-row tile stays within the block
    byte budget."""
    max_cols = max(128, _BLOCK_BYTES // (8 * itemsize))
    best_key, best = None, None
    d = 1
    while d * d <= total:
        if total % d == 0:
            for cols in (d, total // d):
                if cols > max_cols:
                    continue
                rows = total // cols
                padded = _round_up(rows, 8) * _round_up(cols, 128)
                key = (padded, -rows)
                if best_key is None or key < best_key:
                    best_key, best = key, (rows, cols)
        d += 1
    return best  # cols == 1 always qualifies, so never None


def relu_pallas(x):
    """ReLU over an NCHW (or any-rank) tensor using a Pallas TPU kernel."""
    orig_shape = x.shape
    total = 1
    for s in orig_shape:
        total *= int(s)
    itemsize = x.dtype.itemsize
    nbytes = total * itemsize

    rows, cols = _pick_2d(total, itemsize)
    x2d = x.reshape(rows, cols)  # contiguous reshape: metadata only, no copy

    if nbytes <= _BLOCK_BYTES:
        # Small tensor: one VMEM block per TensorCore.  grid=(1,) on
        # single-TC chips (v5e/v6e); on v7x split the rows into two
        # "parallel" blocks so both cores work.
        n_cores = _tensorcores_per_chip()
        if n_cores > 1 and rows >= 8 * n_cores:
            tile_rows = min(rows, _round_up(pl.cdiv(rows, n_cores), 8))
        else:
            tile_rows = rows
    else:
        # Large tensor: byte-budgeted row tiles (multiple of 8 sublanes);
        # Pallas masks the ragged last block, which is harmless for an
        # elementwise op.  cols is capped in _pick_2d so tile_rows >= 8 fits.
        tile_rows = max(8, _round_down(_BLOCK_BYTES // (cols * itemsize), 8))

    grid = (pl.cdiv(rows, tile_rows),)

    out2d = pl.pallas_call(
        _relu_kernel,
        out_shape=jax.ShapeDtypeStruct((rows, cols), x.dtype),
        grid=grid,
        in_specs=[pl.BlockSpec((tile_rows, cols), lambda i: (i, 0))],
        out_specs=pl.BlockSpec((tile_rows, cols), lambda i: (i, 0)),
        # The original module uses ReLU(inplace=True): let XLA alias/donate
        # the input buffer instead of allocating a second HBM output.
        input_output_aliases={0: 0},
        cost_estimate=pl.CostEstimate(
            flops=total, transcendentals=0, bytes_accessed=2 * nbytes),
        compiler_params=pltpu.CompilerParams(
            dimension_semantics=("parallel",),
        ),
    )(x2d)

    return out2d.reshape(orig_shape)


if __name__ == "__main__":
    key = jax.random.PRNGKey(0)
    # Shape matches the module's input: [1, 720, 14, 14] (NCHW).
    x = jax.random.normal(key, (1, 720, 14, 14), dtype=jnp.float32)

    # Reference computed before the kernel call (kernel may alias its input).
    y_ref = jnp.maximum(x, 0.0)

    y = relu_pallas(x)
    y = jax.block_until_ready(y)

    assert y.shape == x.shape and y.dtype == x.dtype
    assert bool(jnp.allclose(y, y_ref)), "mismatch vs reference ReLU"

    print("KERNEL_OK")
</pallas_src>

<mosaic_0001>
module attributes {stable_mosaic.version = 11 : i64} {
  func.func @_relu_kernel(%arg0: i32, %arg1: memref<48x2940xf32, #tpu.memory_space<vmem>>, %arg2: memref<48x2940xf32, #tpu.memory_space<vmem>>) attributes {dimension_semantics = [#tpu.dimension_semantics<parallel>], iteration_bounds = array<i64: 1>, scalar_prefetch = 0 : i64, scratch_operands = 0 : i64, tpu.core_type = #tpu.core_type<tc>, window_params = [{transform_indices = @transform_0, window_bounds = array<i64: 48, 2940>}, {transform_indices = @transform_1, window_bounds = array<i64: 48, 2940>}]} {
    %c0 = arith.constant 0 : index
    %c0_0 = arith.constant 0 : index
    %0 = vector.load %arg1[%c0, %c0_0] : memref<48x2940xf32, #tpu.memory_space<vmem>>, vector<48x2940xf32>
    %cst = arith.constant 0.000000e+00 : f32
    %1 = vector.broadcast %cst : f32 to vector<48x2940xf32>
    %2 = arith.maximumf %0, %1 : vector<48x2940xf32>
    %c0_1 = arith.constant 0 : index
    %c0_2 = arith.constant 0 : index
    %3 = vector.load %arg2[%c0_1, %c0_2] : memref<48x2940xf32, #tpu.memory_space<vmem>>, vector<48x2940xf32>
    tpu.vector_store %arg2[%c0_1, %c0_2], %2 {strides = array<i32>} : memref<48x2940xf32, #tpu.memory_space<vmem>>, vector<48x2940xf32>,
    return
  }
  func.func @transform_0(%arg0: i32) -> (i32, i32) {
    %c0_i32 = arith.constant 0 : i32
    %c0_i32_0 = arith.constant 0 : i32
    return %arg0, %c0_i32 : i32, i32
  }
  func.func @transform_1(%arg0: i32) -> (i32, i32) {
    %c0_i32 = arith.constant 0 : i32
    %c0_i32_0 = arith.constant 0 : i32
    return %arg0, %c0_i32 : i32, i32
  }
}

</mosaic_0001>

<llo_original>
// kernel: tpu_custom_call.1
$region0: #{tpu_custom_call.1}
  #allocation0 [shape = 'u32[]', space=smem, size = 0x4, offset = 0x4, fixed_abs, tag = 'smem constant byte address 0x4 - core index']
  #allocation1 [shape = 'u32[144,128]{1,0:T(1,128)}', space=vmem, size = 0x12000, scoped, tag = 'internal scratch']
  %s0 = inlined_call_operand.hbm [shape: f32[48,2940], index: 0, kind: input, shape index: {}, may-alias: {0,1}]
  %s1 = inlined_call_operand.hbm [shape: f32[48,2940], index: 1, kind: output, shape index: {}, may-alias: {0,1}]
  %s2 = sld [smem:[#allocation0]]
  $region18: #{tpu_custom_call.1} parent=0
    _
  %s4 = ssub.s32 1, %s2
  %s5 = scalar_select 0, %s4, %s2
  $region1: #{tpu_custom_call.1} parent=0
    #allocation2 [shape = 'u8[565248]{0}', space=vmem, size = 0x8a000, scoped, tag = 'input window, operand 0, single buffered']
    #allocation3 [shape = 's32[1]{0}', space=sflag, size = 0x4, scoped, tag = 'scoped memory for tpu_custom_call.1']
    #allocation4 [shape = 's32[1]{0}', space=sflag, size = 0x4, scoped, tag = 'scoped memory for tpu_custom_call.1']
    #allocation5 [shape = 'u8[565248]{0}', space=vmem, size = 0x8a000, scoped, tag = 'output window, operand 0, single buffered']
    %6 = vsyncpa [#allocation3], 0
    %7 = vsyncpa [#allocation4], 0
    // Predicated region
    $region2: #{tpu_custom_call.1} parent=1 // pred_check
      _
    $region3: #{tpu_custom_call.1} parent=1 // pred_check_branch
      %9 = sbr.rel (0) target = $region5
    $region4: #{tpu_custom_call.1} parent=1 // pred_region
      %s11 = ssub.s32 17664, 17664
      %12 = vsyncadd [#allocation3], %s11
      %s13 = sshll.u32 [#allocation2], 4
      %s14 = int_to_ptr.vmem [resolvable:$true] %s13
      %19 = dma.hbm_to_vmem [thread:$0]  %s0, 17664, %s14, [#allocation3], 2944, 2944, 184
    $region5: #{tpu_custom_call.1} parent=1 // pred_fallthru
      _
    // Predicated region
    $region6: #{tpu_custom_call.1} parent=1 // pred_check
      _
    $region7: #{tpu_custom_call.1} parent=1 // pred_check_branch
      %21 = sbr.rel (0) target = $region9
    $region8: #{tpu_custom_call.1} parent=1 // pred_region
      %22 = dma.done [#allocation3], 17664
    $region9: #{tpu_custom_call.1} parent=1 // pred_fallthru
      _
    %v23 = vld [vmem:[#allocation2] sm:$0xff]
    %v24 = vld [vmem:[#allocation2 + $0x8] sm:$0xff]
    %v25 = vld [vmem:[#allocation2 + $0x10] sm:$0xff]
    %v26 = vld [vmem:[#allocation2 + $0x18] sm:$0xff]
    %v27 = vld [vmem:[#allocation2 + $0x20] sm:$0xff]
    %v28 = vld [vmem:[#allocation2 + $0x28] sm:$0xff]
    %v29 = vld [vmem:[#allocation2 + $0x30] sm:$0xff]
    %v30 = vld [vmem:[#allocation2 + $0x38] sm:$0xff]
    %v31 = vld [vmem:[#allocation2 + $0x40] sm:$0xff]
    %v32 = vld [vmem:[#allocation2 + $0x48] sm:$0xff]
    %v33 = vld [vmem:[#allocation2 + $0x50] sm:$0xff]
    %v34 = vld [vmem:[#allocation2 + $0x58] sm:$0xff]
    %v35 = vld [vmem:[#allocation2 + $0x60] sm:$0xff]
    %v36 = vld [vmem:[#allocation2 + $0x68] sm:$0xff]
    %v37 = vld [vmem:[#allocation2 + $0x70] sm:$0xff]
    %v38 = vld [vmem:[#allocation2 + $0x78] sm:$0xff]
    %v39 = vld [vmem:[#allocation2 + $0x80] sm:$0xff]
    %v40 = vld [vmem:[#allocation2 + $0x88] sm:$0xff]
    %v41 = vld [vmem:[#allocation2 + $0x90] sm:$0xff]
    %v42 = vld [vmem:[#allocation2 + $0x98] sm:$0xff]
    %v43 = vld [vmem:[#allocation2 + $0xa0] sm:$0xff]
    %v44 = vld [vmem:[#allocation2 + $0xa8] sm:$0xff]
    %v45 = vld [vmem:[#allocation2 + $0xb0] sm:$0xff]
    %v46 = vld [vmem:[#allocation2 + $0xb8] sm:$0xff]
    %v47 = vld [vmem:[#allocation2 + $0xc0] sm:$0xff]
    %v48 = vld [vmem:[#allocation2 + $0xc8] sm:$0xff]
    %v49 = vld [vmem:[#allocation2 + $0xd0] sm:$0xff]
    %v50 = vld [vmem:[#allocation2 + $0xd8] sm:$0xff]
    %v51 = vld [vmem:[#allocation2 + $0xe0] sm:$0xff]
    %v52 = vld [vmem:[#allocation2 + $0xe8] sm:$0xff]
    %v53 = vld [vmem:[#allocation2 + $0xf0] sm:$0xff]
    %v54 = vld [vmem:[#allocation2 + $0xf8] sm:$0xff]
    %v55 = vld [vmem:[#allocation2 + $0x100] sm:$0xff]
    %v56 = vld [vmem:[#allocation2 + $0x108] sm:$0xff]
    %v57 = vld [vmem:[#allocation2 + $0x110] sm:$0xff]
    %v58 = vld [vmem:[#allocation2 + $0x118] sm:$0xff]
    %v59 = vld [vmem:[#allocation2 + $0x120] sm:$0xff]
    %v60 = vld [vmem:[#allocation2 + $0x128] sm:$0xff]
    %v61 = vld [vmem:[#allocation2 + $0x130] sm:$0xff]
    %v62 = vld [vmem:[#allocation2 + $0x138] sm:$0xff]
    %v63 = vld [vmem:[#allocation2 + $0x140] sm:$0xff]
    %v64 = vld [vmem:[#allocation2 + $0x148] sm:$0xff]
    %v65 = vld [vmem:[#allocation2 + $0x150] sm:$0xff]
    %v66 = vld [vmem:[#allocation2 + $0x158] sm:$0xff]
    %v67 = vld [vmem:[#allocation2 + $0x160] sm:$0xff]
    %v68 = vld [vmem:[#allocation2 + $0x168] sm:$0xff]
    %v69 = vld [vmem:[#allocation2 + $0x170] sm:$0xff]
    %v70 = vld [vmem:[#allocation2 + $0x178] sm:$0xff]
    %v71 = vld [vmem:[#allocation2 + $0x180] sm:$0xff]
    %v72 = vld [vmem:[#allocation2 + $0x188] sm:$0xff]
    %v73 = vld [vmem:[#allocation2 + $0x190] sm:$0xff]
    %v74 = vld [vmem:[#allocation2 + $0x198] sm:$0xff]
    %v75 = vld [vmem:[#allocation2 + $0x1a0] sm:$0xff]
    %v76 = vld [vmem:[#allocation2 + $0x1a8] sm:$0xff]
    %v77 = vld [vmem:[#allocation2 + $0x1b0] sm:$0xff]
    %v78 = vld [vmem:[#allocation2 + $0x1b8] sm:$0xff]
    %v79 = vld [vmem:[#allocation2 + $0x1c0] sm:$0xff]
    %v80 = vld [vmem:[#allocation2 + $0x1c8] sm:$0xff]
    %v81 = vld [vmem:[#allocation2 + $0x1d0] sm:$0xff]
    %v82 = vld [vmem:[#allocation2 + $0x1d8] sm:$0xff]
    %v83 = vld [vmem:[#allocation2 + $0x1e0] sm:$0xff]
    %v84 = vld [vmem:[#allocation2 + $0x1e8] sm:$0xff]
    %v85 = vld [vmem:[#allocation2 + $0x1f0] sm:$0xff]
    %v86 = vld [vmem:[#allocation2 + $0x1f8] sm:$0xff]
    %v87 = vld [vmem:[#allocation2 + $0x200] sm:$0xff]
    %v88 = vld [vmem:[#allocation2 + $0x208] sm:$0xff]
    %v89 = vld [vmem:[#allocation2 + $0x210] sm:$0xff]
    %v90 = vld [vmem:[#allocation2 + $0x218] sm:$0xff]
    %v91 = vld [vmem:[#allocation2 + $0x220] sm:$0xff]
    %v92 = vld [vmem:[#allocation2 + $0x228] sm:$0xff]
    %v93 = vld [vmem:[#allocation2 + $0x230] sm:$0xff]
    %v94 = vld [vmem:[#allocation2 + $0x238] sm:$0xff]
    %v95 = vld [vmem:[#allocation2 + $0x240] sm:$0xff]
    %v96 = vld [vmem:[#allocation2 + $0x248] sm:$0xff]
    %v97 = vld [vmem:[#allocation2 + $0x250] sm:$0xff]
    %v98 = vld [vmem:[#allocation2 + $0x258] sm:$0xff]
    %v99 = vld [vmem:[#allocation2 + $0x260] sm:$0xff]
    %v100 = vld [vmem:[#allocation2 + $0x268] sm:$0xff]
    %v101 = vld [vmem:[#allocation2 + $0x270] sm:$0xff]
    %v102 = vld [vmem:[#allocation2 + $0x278] sm:$0xff]
    %v103 = vld [vmem:[#allocation2 + $0x280] sm:$0xff]
    %v104 = vld [vmem:[#allocation2 + $0x288] sm:$0xff]
    %v105 = vld [vmem:[#allocation2 + $0x290] sm:$0xff]
    %v106 = vld [vmem:[#allocation2 + $0x298] sm:$0xff]
    %v107 = vld [vmem:[#allocation2 + $0x2a0] sm:$0xff]
    %v108 = vld [vmem:[#allocation2 + $0x2a8] sm:$0xff]
    %v109 = vld [vmem:[#allocation2 + $0x2b0] sm:$0xff]
    %v110 = vld [vmem:[#allocation2 + $0x2b8] sm:$0xff]
    %v111 = vld [vmem:[#allocation2 + $0x2c0] sm:$0xff]
    %v112 = vld [vmem:[#allocation2 + $0x2c8] sm:$0xff]
    %v113 = vld [vmem:[#allocation2 + $0x2d0] sm:$0xff]
    %v114 = vld [vmem:[#allocation2 + $0x2d8] sm:$0xff]
    %v115 = vld [vmem:[#allocation2 + $0x2e0] sm:$0xff]
    %v116 = vld [vmem:[#allocation2 + $0x2e8] sm:$0xff]
    %v117 = vld [vmem:[#allocation2 + $0x2f0] sm:$0xff]
    %v118 = vld [vmem:[#allocation2 + $0x2f8] sm:$0xff]
    %v119 = vld [vmem:[#allocation2 + $0x300] sm:$0xff]
    %v120 = vld [vmem:[#allocation2 + $0x308] sm:$0xff]
    %v121 = vld [vmem:[#allocation2 + $0x310] sm:$0xff]
    %v122 = vld [vmem:[#allocation2 + $0x318] sm:$0xff]
    %v123 = vld [vmem:[#allocation2 + $0x320] sm:$0xff]
    %v124 = vld [vmem:[#allocation2 + $0x328] sm:$0xff]
    %v125 = vld [vmem:[#allocation2 + $0x330] sm:$0xff]
    %v126 = vld [vmem:[#allocation2 + $0x338] sm:$0xff]
    %v127 = vld [vmem:[#allocation2 + $0x340] sm:$0xff]
    %v128 = vld [vmem:[#allocation2 + $0x348] sm:$0xff]
    %v129 = vld [vmem:[#allocation2 + $0x350] sm:$0xff]
    %v130 = vld [vmem:[#allocation2 + $0x358] sm:$0xff]
    %v131 = vld [vmem:[#allocation2 + $0x360] sm:$0xff]
    %v132 = vld [vmem:[#allocation2 + $0x368] sm:$0xff]
    %v133 = vld [vmem:[#allocation2 + $0x370] sm:$0xff]
    %v134 = vld [vmem:[#allocation2 + $0x378] sm:$0xff]
    %v135 = vld [vmem:[#allocation2 + $0x380] sm:$0xff]
    %v136 = vld [vmem:[#allocation2 + $0x388] sm:$0xff]
    %v137 = vld [vmem:[#allocation2 + $0x390] sm:$0xff]
    %v138 = vld [vmem:[#allocation2 + $0x398] sm:$0xff]
    %v139 = vld [vmem:[#allocation2 + $0x3a0] sm:$0xff]
    %v140 = vld [vmem:[#allocation2 + $0x3a8] sm:$0xff]
    %v141 = vld [vmem:[#allocation2 + $0x3b0] sm:$0xff]
    %v142 = vld [vmem:[#allocation2 + $0x3b8] sm:$0xff]
    %v143 = vld [vmem:[#allocation2 + $0x3c0] sm:$0xff]
    %v144 = vld [vmem:[#allocation2 + $0x3c8] sm:$0xff]
    %v145 = vld [vmem:[#allocation2 + $0x3d0] sm:$0xff]
    %v146 = vld [vmem:[#allocation2 + $0x3d8] sm:$0xff]
    %v147 = vld [vmem:[#allocation2 + $0x3e0] sm:$0xff]
    %v148 = vld [vmem:[#allocation2 + $0x3e8] sm:$0xff]
    %v149 = vld [vmem:[#allocation2 + $0x3f0] sm:$0xff]
    %v150 = vld [vmem:[#allocation2 + $0x3f8] sm:$0xff]
    %v151 = vld [vmem:[#allocation2 + $0x400] sm:$0xff]
    %v152 = vld [vmem:[#allocation2 + $0x408] sm:$0xff]
    %v153 = vld [vmem:[#allocation2 + $0x410] sm:$0xff]
    %v154 = vld [vmem:[#allocation2 + $0x418] sm:$0xff]
    %v155 = vld [vmem:[#allocation2 + $0x420] sm:$0xff]
    %v156 = vld [vmem:[#allocation2 + $0x428] sm:$0xff]
    %v157 = vld [vmem:[#allocation2 + $0x430] sm:$0xff]
    %v158 = vld [vmem:[#allocation2 + $0x438] sm:$0xff]
    %v159 = vld [vmem:[#allocation2 + $0x440] sm:$0xff]
    %v160 = vld [vmem:[#allocation2 + $0x448] sm:$0xff]
    %v161 = vmax.f32 %v23, 0.0
    %v162 = vmax.f32 %v24, 0.0
    %v163 = vmax.f32 %v25, 0.0
    %v164 = vmax.f32 %v26, 0.0
    %v165 = vmax.f32 %v27, 0.0
    %v166 = vmax.f32 %v28, 0.0
    %v167 = vmax.f32 %v29, 0.0
    %v168 = vmax.f32 %v30, 0.0
    %v169 = vmax.f32 %v31, 0.0
    %v170 = vmax.f32 %v32, 0.0
    %v171 = vmax.f32 %v33, 0.0
    %v172 = vmax.f32 %v34, 0.0
    %v173 = vmax.f32 %v35, 0.0
    %v174 = vmax.f32 %v36, 0.0
    %v175 = vmax.f32 %v37, 0.0
    %v176 = vmax.f32 %v38, 0.0
    %v177 = vmax.f32 %v39, 0.0
    %v178 = vmax.f32 %v40, 0.0
    %v179 = vmax.f32 %v41, 0.0
    %v180 = vmax.f32 %v42, 0.0
    %v181 = vmax.f32 %v43, 0.0
    %v182 = vmax.f32 %v44, 0.0
    %v183 = vmax.f32 %v45, 0.0
    %v184 = vmax.f32 %v46, 0.0
    %v185 = vmax.f32 %v47, 0.0
    %v186 = vmax.f32 %v48, 0.0
    %v187 = vmax.f32 %v49, 0.0
    %v188 = vmax.f32 %v50, 0.0
    %v189 = vmax.f32 %v51, 0.0
    %v190 = vmax.f32 %v52, 0.0
    %v191 = vmax.f32 %v53, 0.0
    %v192 = vmax.f32 %v54, 0.0
    %v193 = vmax.f32 %v55, 0.0
    %v194 = vmax.f32 %v56, 0.0
    %v195 = vmax.f32 %v57, 0.0
    %v196 = vmax.f32 %v58, 0.0
    %v197 = vmax.f32 %v59, 0.0
    %v198 = vmax.f32 %v60, 0.0
    %v199 = vmax.f32 %v61, 0.0
    %v200 = vmax.f32 %v62, 0.0
    %v201 = vmax.f32 %v63, 0.0
    %v202 = vmax.f32 %v64, 0.0
    %v203 = vmax.f32 %v65, 0.0
    %v204 = vmax.f32 %v66, 0.0
    %v205 = vmax.f32 %v67, 0.0
    %v206 = vmax.f32 %v68, 0.0
    %v207 = vmax.f32 %v69, 0.0
    %v208 = vmax.f32 %v70, 0.0
    %v209 = vmax.f32 %v71, 0.0
    %v210 = vmax.f32 %v72, 0.0
    %v211 = vmax.f32 %v73, 0.0
    %v212 = vmax.f32 %v74, 0.0
    %v213 = vmax.f32 %v75, 0.0
    %v214 = vmax.f32 %v76, 0.0
    %v215 = vmax.f32 %v77, 0.0
    %v216 = vmax.f32 %v78, 0.0
    %v217 = vmax.f32 %v79, 0.0
    %v218 = vmax.f32 %v80, 0.0
    %v219 = vmax.f32 %v81, 0.0
    %v220 = vmax.f32 %v82, 0.0
    %v221 = vmax.f32 %v83, 0.0
    %v222 = vmax.f32 %v84, 0.0
    %v223 = vmax.f32 %v85, 0.0
    %v224 = vmax.f32 %v86, 0.0
    %v225 = vmax.f32 %v87, 0.0
    %v226 = vmax.f32 %v88, 0.0
    %v227 = vmax.f32 %v89, 0.0
    %v228 = vmax.f32 %v90, 0.0
    %v229 = vmax.f32 %v91, 0.0
    %v230 = vmax.f32 %v92, 0.0
    %v231 = vmax.f32 %v93, 0.0
    %v232 = vmax.f32 %v94, 0.0
    %v233 = vmax.f32 %v95, 0.0
    %v234 = vmax.f32 %v96, 0.0
    %v235 = vmax.f32 %v97, 0.0
    %v236 = vmax.f32 %v98, 0.0
    %v237 = vmax.f32 %v99, 0.0
    %v238 = vmax.f32 %v100, 0.0
    %v239 = vmax.f32 %v101, 0.0
    %v240 = vmax.f32 %v102, 0.0
    %v241 = vmax.f32 %v103, 0.0
    %v242 = vmax.f32 %v104, 0.0
    %v243 = vmax.f32 %v105, 0.0
    %v244 = vmax.f32 %v106, 0.0
    %v245 = vmax.f32 %v107, 0.0
    %v246 = vmax.f32 %v108, 0.0
    %v247 = vmax.f32 %v109, 0.0
    %v248 = vmax.f32 %v110, 0.0
    %v249 = vmax.f32 %v111, 0.0
    %v250 = vmax.f32 %v112, 0.0
    %v251 = vmax.f32 %v113, 0.0
    %v252 = vmax.f32 %v114, 0.0
    %v253 = vmax.f32 %v115, 0.0
    %v254 = vmax.f32 %v116, 0.0
    %v255 = vmax.f32 %v117, 0.0
    %v256 = vmax.f32 %v118, 0.0
    %v257 = vmax.f32 %v119, 0.0
    %v258 = vmax.f32 %v120, 0.0
    %v259 = vmax.f32 %v121, 0.0
    %v260 = vmax.f32 %v122, 0.0
    %v261 = vmax.f32 %v123, 0.0
    %v262 = vmax.f32 %v124, 0.0
    %v263 = vmax.f32 %v125, 0.0
    %v264 = vmax.f32 %v126, 0.0
    %v265 = vmax.f32 %v127, 0.0
    %v266 = vmax.f32 %v128, 0.0
    %v267 = vmax.f32 %v129, 0.0
    %v268 = vmax.f32 %v130, 0.0
    %v269 = vmax.f32 %v131, 0.0
    %v270 = vmax.f32 %v132, 0.0
    %v271 = vmax.f32 %v133, 0.0
    %v272 = vmax.f32 %v134, 0.0
    %v273 = vmax.f32 %v135, 0.0
    %v274 = vmax.f32 %v136, 0.0
    %v275 = vmax.f32 %v137, 0.0
    %v276 = vmax.f32 %v138, 0.0
    %v277 = vmax.f32 %v139, 0.0
    %v278 = vmax.f32 %v140, 0.0
    %v279 = vmax.f32 %v141, 0.0
    %v280 = vmax.f32 %v142, 0.0
    %v281 = vmax.f32 %v143, 0.0
    %v282 = vmax.f32 %v144, 0.0
    %v283 = vmax.f32 %v145, 0.0
    %v284 = vmax.f32 %v146, 0.0
    %v285 = vmax.f32 %v147, 0.0
    %v286 = vmax.f32 %v148, 0.0
    %v287 = vmax.f32 %v149, 0.0
    %v288 = vmax.f32 %v150, 0.0
    %v289 = vmax.f32 %v151, 0.0
    %v290 = vmax.f32 %v152, 0.0
    %v291 = vmax.f32 %v153, 0.0
    %v292 = vmax.f32 %v154, 0.0
    %v293 = vmax.f32 %v155, 0.0
    %v294 = vmax.f32 %v156, 0.0
    %v295 = vmax.f32 %v157, 0.0
    %v296 = vmax.f32 %v158, 0.0
    %v297 = vmax.f32 %v159, 0.0
    %v298 = vmax.f32 %v160, 0.0
    %299 = vst [vmem:[#allocation5] sm:$0xff] %v161
    %300 = vst [vmem:[#allocation5 + $0x8] sm:$0xff] %v162
    %301 = vst [vmem:[#allocation5 + $0x10] sm:$0xff] %v163
    %302 = vst [vmem:[#allocation5 + $0x18] sm:$0xff] %v164
    %303 = vst [vmem:[#allocation5 + $0x20] sm:$0xff] %v165
    %304 = vst [vmem:[#allocation5 + $0x28] sm:$0xff] %v166
    %305 = vst [vmem:[#allocation5 + $0x30] sm:$0xff] %v167
    %306 = vst [vmem:[#allocation5 + $0x38] sm:$0xff] %v168
    %307 = vst [vmem:[#allocation5 + $0x40] sm:$0xff] %v169
    %308 = vst [vmem:[#allocation5 + $0x48] sm:$0xff] %v170
    %309 = vst [vmem:[#allocation5 + $0x50] sm:$0xff] %v171
    %310 = vst [vmem:[#allocation5 + $0x58] sm:$0xff] %v172
    %311 = vst [vmem:[#allocation5 + $0x60] sm:$0xff] %v173
    %312 = vst [vmem:[#allocation5 + $0x68] sm:$0xff] %v174
    %313 = vst [vmem:[#allocation5 + $0x70] sm:$0xff] %v175
    %314 = vst [vmem:[#allocation5 + $0x78] sm:$0xff] %v176
    %315 = vst [vmem:[#allocation5 + $0x80] sm:$0xff] %v177
    %316 = vst [vmem:[#allocation5 + $0x88] sm:$0xff] %v178
    %317 = vst [vmem:[#allocation5 + $0x90] sm:$0xff] %v179
    %318 = vst [vmem:[#allocation5 + $0x98] sm:$0xff] %v180
    %319 = vst [vmem:[#allocation5 + $0xa0] sm:$0xff] %v181
    %320 = vst [vmem:[#allocation5 + $0xa8] sm:$0xff] %v182
    %vm321 = vcmask 1014784
    %322 = vst.msk [vmem:[#allocation5 + $0xb0] sm:$0xff] %vm321, %v183
    %323 = vst [vmem:[#allocation5 + $0xb8] sm:$0xff] %v184
    %324 = vst [vmem:[#allocation5 + $0xc0] sm:$0xff] %v185
    %325 = vst [vmem:[#allocation5 + $0xc8] sm:$0xff] %v186
    %326 = vst [vmem:[#allocation5 + $0xd0] sm:$0xff] %v187
    %327 = vst [vmem:[#allocation5 + $0xd8] sm:$0xff] %v188
    %328 = vst [vmem:[#allocation5 + $0xe0] sm:$0xff] %v189
    %329 = vst [vmem:[#allocation5 + $0xe8] sm:$0xff] %v190
    %330 = vst [vmem:[#allocation5 + $0xf0] sm:$0xff] %v191
    %331 = vst [vmem:[#allocation5 + $0xf8] sm:$0xff] %v192
    %332 = vst [vmem:[#allocation5 + $0x100] sm:$0xff] %v193
    %333 = vst [vmem:[#allocation5 + $0x108] sm:$0xff] %v194
    %334 = vst [vmem:[#allocation5 + $0x110] sm:$0xff] %v195
    %335 = vst [vmem:[#allocation5 + $0x118] sm:$0xff] %v196
    %336 = vst [vmem:[#allocation5 + $0x120] sm:$0xff] %v197
    %337 = vst [vmem:[#allocation5 + $0x128] sm:$0xff] %v198
    %338 = vst [vmem:[#allocation5 + $0x130] sm:$0xff] %v199
    %339 = vst [vmem:[#allocation5 + $0x138] sm:$0xff] %v200
    %340 = vst [vmem:[#allocation5 + $0x140] sm:$0xff] %v201
    %341 = vst [vmem:[#allocation5 + $0x148] sm:$0xff] %v202
    %342 = vst [vmem:[#allocation5 + $0x150] sm:$0xff] %v203
    %343 = vst [vmem:[#allocation5 + $0x158] sm:$0xff] %v204
    %344 = vst [vmem:[#allocation5 + $0x160] sm:$0xff] %v205
    %345 = vst.msk [vmem:[#allocation5 + $0x168] sm:$0xff] %vm321, %v206
    %346 = vst [vmem:[#allocation5 + $0x170] sm:$0xff] %v207
    %347 = vst [vmem:[#allocation5 + $0x178] sm:$0xff] %v208
    %348 = vst [vmem:[#allocation5 + $0x180] sm:$0xff] %v209
    %349 = vst [vmem:[#allocation5 + $0x188] sm:$0xff] %v210
    %350 = vst [vmem:[#allocation5 + $0x190] sm:$0xff] %v211
    %351 = vst [vmem:[#allocation5 + $0x198] sm:$0xff] %v212
    %352 = vst [vmem:[#allocation5 + $0x1a0] sm:$0xff] %v213
    %353 = vst [vmem:[#allocation5 + $0x1a8] sm:$0xff] %v214
    %354 = vst [vmem:[#allocation5 + $0x1b0] sm:$0xff] %v215
    %355 = vst [vmem:[#allocation5 + $0x1b8] sm:$0xff] %v216
    %356 = vst [vmem:[#allocation5 + $0x1c0] sm:$0xff] %v217
    %357 = vst [vmem:[#allocation5 + $0x1c8] sm:$0xff] %v218
    %358 = vst [vmem:[#allocation5 + $0x1d0] sm:$0xff] %v219
    %359 = vst [vmem:[#allocation5 + $0x1d8] sm:$0xff] %v220
    %360 = vst [vmem:[#allocation5 + $0x1e0] sm:$0xff] %v221
    %361 = vst [vmem:[#allocation5 + $0x1e8] sm:$0xff] %v222
    %362 = vst [vmem:[#allocation5 + $0x1f0] sm:$0xff] %v223
    %363 = vst [vmem:[#allocation5 + $0x1f8] sm:$0xff] %v224
    %364 = vst [vmem:[#allocation5 + $0x200] sm:$0xff] %v225
    %365 = vst [vmem:[#allocation5 + $0x208] sm:$0xff] %v226
    %366 = vst [vmem:[#allocation5 + $0x210] sm:$0xff] %v227
    %367 = vst [vmem:[#allocation5 + $0x218] sm:$0xff] %v228
    %368 = vst.msk [vmem:[#allocation5 + $0x220] sm:$0xff] %vm321, %v229
    %369 = vst [vmem:[#allocation5 + $0x228] sm:$0xff] %v230
    %370 = vst [vmem:[#allocation5 + $0x230] sm:$0xff] %v231
    %371 = vst [vmem:[#allocation5 + $0x238] sm:$0xff] %v232
    %372 = vst [vmem:[#allocation5 + $0x240] sm:$0xff] %v233
    %373 = vst [vmem:[#allocation5 + $0x248] sm:$0xff] %v234
    %374 = vst [vmem:[#allocation5 + $0x250] sm:$0xff] %v235
    %375 = vst [vmem:[#allocation5 + $0x258] sm:$0xff] %v236
    %376 = vst [vmem:[#allocation5 + $0x260] sm:$0xff] %v237
    %377 = vst [vmem:[#allocation5 + $0x268] sm:$0xff] %v238
    %378 = vst [vmem:[#allocation5 + $0x270] sm:$0xff] %v239
    %379 = vst [vmem:[#allocation5 + $0x278] sm:$0xff] %v240
    %380 = vst [vmem:[#allocation5 + $0x280] sm:$0xff] %v241
    %381 = vst [vmem:[#allocation5 + $0x288] sm:$0xff] %v242
    %382 = vst [vmem:[#allocation5 + $0x290] sm:$0xff] %v243
    %383 = vst [vmem:[#allocation5 + $0x298] sm:$0xff] %v244
    %384 = vst [vmem:[#allocation5 + $0x2a0] sm:$0xff] %v245
    %385 = vst [vmem:[#allocation5 + $0x2a8] sm:$0xff] %v246
    %386 = vst [vmem:[#allocation5 + $0x2b0] sm:$0xff] %v247
    %387 = vst [vmem:[#allocation5 + $0x2b8] sm:$0xff] %v248
    %388 = vst [vmem:[#allocation5 + $0x2c0] sm:$0xff] %v249
    %389 = vst [vmem:[#allocation5 + $0x2c8] sm:$0xff] %v250
    %390 = vst [vmem:[#allocation5 + $0x2d0] sm:$0xff] %v251
    %391 = vst.msk [vmem:[#allocation5 + $0x2d8] sm:$0xff] %vm321, %v252
    %392 = vst [vmem:[#allocation5 + $0x2e0] sm:$0xff] %v253
    %393 = vst [vmem:[#allocation5 + $0x2e8] sm:$0xff] %v254
    %394 = vst [vmem:[#allocation5 + $0x2f0] sm:$0xff] %v255
    %395 = vst [vmem:[#allocation5 + $0x2f8] sm:$0xff] %v256
    %396 = vst [vmem:[#allocation5 + $0x300] sm:$0xff] %v257
    %397 = vst [vmem:[#allocation5 + $0x308] sm:$0xff] %v258
    %398 = vst [vmem:[#allocation5 + $0x310] sm:$0xff] %v259
    %399 = vst [vmem:[#allocation5 + $0x318] sm:$0xff] %v260
    %400 = vst [vmem:[#allocation5 + $0x320] sm:$0xff] %v261
    %401 = vst [vmem:[#allocation5 + $0x328] sm:$0xff] %v262
    %402 = vst [vmem:[#allocation5 + $0x330] sm:$0xff] %v263
    %403 = vst [vmem:[#allocation5 + $0x338] sm:$0xff] %v264
    %404 = vst [vmem:[#allocation5 + $0x340] sm:$0xff] %v265
    %405 = vst [vmem:[#allocation5 + $0x348] sm:$0xff] %v266
    %406 = vst [vmem:[#allocation5 + $0x350] sm:$0xff] %v267
    %407 = vst [vmem:[#allocation5 + $0x358] sm:$0xff] %v268
    %408 = vst [vmem:[#allocation5 + $0x360] sm:$0xff] %v269
    %409 = vst [vmem:[#allocation5 + $0x368] sm:$0xff] %v270
    %410 = vst [vmem:[#allocation5 + $0x370] sm:$0xff] %v271
    %411 = vst [vmem:[#allocation5 + $0x378] sm:$0xff] %v272
    %412 = vst [vmem:[#allocation5 + $0x380] sm:$0xff] %v273
    %413 = vst [vmem:[#allocation5 + $0x388] sm:$0xff] %v274
    %414 = vst.msk [vmem:[#allocation5 + $0x390] sm:$0xff] %vm321, %v275
    %415 = vst [vmem:[#allocation5 + $0x398] sm:$0xff] %v276
    %416 = vst [vmem:[#allocation5 + $0x3a0] sm:$0xff] %v277
    %417 = vst [vmem:[#allocation5 + $0x3a8] sm:$0xff] %v278
    %418 = vst [vmem:[#allocation5 + $0x3b0] sm:$0xff] %v279
    %419 = vst [vmem:[#allocation5 + $0x3b8] sm:$0xff] %v280
    %420 = vst [vmem:[#allocation5 + $0x3c0] sm:$0xff] %v281
    %421 = vst [vmem:[#allocation5 + $0x3c8] sm:$0xff] %v282
    %422 = vst [vmem:[#allocation5 + $0x3d0] sm:$0xff] %v283
    %423 = vst [vmem:[#allocation5 + $0x3d8] sm:$0xff] %v284
    %424 = vst [vmem:[#allocation5 + $0x3e0] sm:$0xff] %v285
    %425 = vst [vmem:[#allocation5 + $0x3e8] sm:$0xff] %v286
    %426 = vst [vmem:[#allocation5 + $0x3f0] sm:$0xff] %v287
    %427 = vst [vmem:[#allocation5 + $0x3f8] sm:$0xff] %v288
    %428 = vst [vmem:[#allocation5 + $0x400] sm:$0xff] %v289
    %429 = vst [vmem:[#allocation5 + $0x408] sm:$0xff] %v290
    %430 = vst [vmem:[#allocation5 + $0x410] sm:$0xff] %v291
    %431 = vst [vmem:[#allocation5 + $0x418] sm:$0xff] %v292
    %432 = vst [vmem:[#allocation5 + $0x420] sm:$0xff] %v293
    %433 = vst [vmem:[#allocation5 + $0x428] sm:$0xff] %v294
    %434 = vst [vmem:[#allocation5 + $0x430] sm:$0xff] %v295
    %435 = vst [vmem:[#allocation5 + $0x438] sm:$0xff] %v296
    %436 = vst [vmem:[#allocation5 + $0x440] sm:$0xff] %v297
    %437 = vst.msk [vmem:[#allocation5 + $0x448] sm:$0xff] %vm321, %v298
    // Predicated region
    $region10: #{tpu_custom_call.1} parent=1 // pred_check
      _
    $region11: #{tpu_custom_call.1} parent=1 // pred_check_branch
      %439 = sbr.rel (0) target = $region13
    $region12: #{tpu_custom_call.1} parent=1 // pred_region
      %s441 = ssub.s32 17664, 17664
      %442 = vsyncadd [#allocation4], %s441
      %s443 = sshll.u32 [#allocation5], 4
      %s444 = int_to_ptr.vmem [resolvable:$true] %s443
      %449 = dma.vmem_to_hbm [thread:$0]  %s444, 17664, %s1, [#allocation4], 2944, 2944, 184
    $region13: #{tpu_custom_call.1} parent=1 // pred_fallthru
      _
    // Predicated region
    $region14: #{tpu_custom_call.1} parent=1 // pred_check
      _
    $region15: #{tpu_custom_call.1} parent=1 // pred_check_branch
      %451 = sbr.rel (0) target = $region17
    $region16: #{tpu_custom_call.1} parent=1 // pred_region
      %452 = dma.done [#allocation4], 17664
    $region17: #{tpu_custom_call.1} parent=1 // pred_fallthru
      _
    %453 = vsyncpa [#allocation3], 1
    %454 = vsyncpa [#allocation4], 1

</llo_original>
